<compile_context>
chip_gen: v7x
topology: tpu7x:2x2x1
jax: 0.10.0
libtpu: 0.0.40
codegen_flags: <defaults>
</compile_context>

<pallas_src>
from dataclasses import dataclass

import numpy as np
import jax
import jax.numpy as jnp
from jax.experimental import pallas as pl
from jax.experimental.pallas import tpu as pltpu  # noqa: F401  (TPU backend assumed)


@dataclass
class RadarConfig:
    num_azimuth_bins: int = 8
    num_range_bins: int = 16
    num_elevation_bins: int = 8
    range_bin_width: float = 0.125
    clipped_azimuth_bins: tuple = ()
    clipped_elevation_bins: tuple = ()


def polar_to_cartesian_kernel(lane_ref, el_ref, polar_ref, out_ref):
    # lane_ref : (3, AR)   rows = [range*caw*cos(az), range*saw*sin(az), range] per (a,r) lane
    # el_ref   : (E, 2)    cols = [cew*cos(el), sew*sin(el)] per elevation sublane
    # polar_ref: (B, E, AR) intensities (lane-dense)
    # out_ref  : (4, B, E, AR) channels [x, y, z, intensity], each (E, AR) slab = one vreg
    B, E, AR = polar_ref.shape

    rg_cos_az = lane_ref[0:1, :]        # (1, AR)
    rg_sin_az = lane_ref[1:2, :]        # (1, AR)
    rg        = lane_ref[2:3, :]        # (1, AR)

    cos_el = el_ref[:, 0:1]             # (E, 1)
    sin_el = el_ref[:, 1:2]             # (E, 1)

    x = cos_el * rg_cos_az              # (E, AR)  one unmasked vreg
    y = cos_el * rg_sin_az              # (E, AR)
    z = sin_el * rg                     # (E, AR)

    out_ref[0] = jnp.broadcast_to(x, (B, E, AR))
    out_ref[1] = jnp.broadcast_to(y, (B, E, AR))
    out_ref[2] = jnp.broadcast_to(z, (B, E, AR))
    out_ref[3] = polar_ref[...]


def polar_to_cartesian(polar_frames, params, cfg):
    B = polar_frames.shape[0]
    A, R, E = cfg.num_azimuth_bins, cfg.num_range_bins, cfg.num_elevation_bins
    AR = A * R

    # ---- parameter precompute (plain JAX; grid-/batch-invariant, done once) ----
    az_bins = jnp.asarray(cfg.clipped_azimuth_bins, jnp.float32)
    el_bins = jnp.asarray(cfg.clipped_elevation_bins, jnp.float32)
    rg_base = jnp.linspace(0.0, R * cfg.range_bin_width, R, dtype=jnp.float32)

    azimuths = az_bins * params["azimuth_scale"] + params["azimuth_bias"]        # (A,)
    elevations = el_bins * params["elevation_scale"] + params["elevation_bias"]  # (E,)
    ranges = rg_base * params["range_scale"] + params["range_bias"]              # (R,)

    cos_az = params["azimuth_cos_weight"] * jnp.cos(azimuths)                    # (A,)
    sin_az = params["azimuth_sin_weight"] * jnp.sin(azimuths)                    # (A,)
    cos_el = params["elevation_cos_weight"] * jnp.cos(elevations)                # (E,)
    sin_el = params["elevation_sin_weight"] * jnp.sin(elevations)                # (E,)

    # lane index = a*R + r (same ordering as torch.meshgrid 'ij' + flatten)
    rg_cos_az = (cos_az[:, None] * ranges[None, :]).reshape(AR)                  # (AR,)
    rg_sin_az = (sin_az[:, None] * ranges[None, :]).reshape(AR)                  # (AR,)
    rg_lane = jnp.tile(ranges, A)                                                # (AR,)

    lane_params = jnp.stack([rg_cos_az, rg_sin_az, rg_lane], axis=0)             # (3, AR)
    el_params = jnp.stack([cos_el, sin_el], axis=1)                              # (E, 2)

    # (B, A, R, E) -> (B, E, AR): elevation on sublanes, flattened (a, r) on lanes.
    polar_ear = polar_frames.reshape(B, AR, E).transpose(0, 2, 1).astype(jnp.float32)

    # Single-step call: whole problem (a few tens of KB) lives in VMEM; no grid overhead.
    out = pl.pallas_call(
        polar_to_cartesian_kernel,
        out_shape=jax.ShapeDtypeStruct((4, B, E, AR), jnp.float32),
    )(lane_params, el_params, polar_ear)

    # (4, B, E, AR) -> (B, AR, E, 4) -> (B, A*R*E, 4), matching the PyTorch output exactly.
    return out.transpose(1, 3, 2, 0).reshape(B, AR * E, 4)


def reference(polar_frames, params, cfg):
    """Pure-JAX mirror of the PyTorch forward for verification."""
    B = polar_frames.shape[0]
    az = jnp.asarray(cfg.clipped_azimuth_bins, jnp.float32) * params["azimuth_scale"] + params["azimuth_bias"]
    rg = (jnp.linspace(0.0, cfg.num_range_bins * cfg.range_bin_width, cfg.num_range_bins, dtype=jnp.float32)
          * params["range_scale"] + params["range_bias"])
    el = jnp.asarray(cfg.clipped_elevation_bins, jnp.float32) * params["elevation_scale"] + params["elevation_bias"]
    ag, rgg, eg = jnp.meshgrid(az, rg, el, indexing="ij")
    ag = jnp.broadcast_to(ag[None], (B,) + ag.shape)
    rgg = jnp.broadcast_to(rgg[None], (B,) + rgg.shape)
    eg = jnp.broadcast_to(eg[None], (B,) + eg.shape)
    cos_a = params["azimuth_cos_weight"].reshape(1, -1, 1, 1) * jnp.cos(ag)
    sin_a = params["azimuth_sin_weight"].reshape(1, -1, 1, 1) * jnp.sin(ag)
    cos_e = params["elevation_cos_weight"].reshape(1, 1, 1, -1) * jnp.cos(eg)
    sin_e = params["elevation_sin_weight"].reshape(1, 1, 1, -1) * jnp.sin(eg)
    x = (rgg * cos_e * cos_a).reshape(B, -1, 1)
    y = (rgg * cos_e * sin_a).reshape(B, -1, 1)
    z = (rgg * sin_e).reshape(B, -1, 1)
    inten = polar_frames.reshape(B, -1, 1)
    return jnp.concatenate([x, y, z, inten], axis=-1)


if __name__ == "__main__":
    cfg = RadarConfig(
        num_azimuth_bins=8,
        num_range_bins=16,
        num_elevation_bins=8,
        range_bin_width=0.125,
        clipped_azimuth_bins=tuple(np.linspace(-np.pi / 3, np.pi / 3, 8).tolist()),
        clipped_elevation_bins=tuple(np.linspace(-np.pi / 6, np.pi / 6, 8).tolist()),
    )
    A, R, E = cfg.num_azimuth_bins, cfg.num_range_bins, cfg.num_elevation_bins

    # Deterministic parameter init matching the module's __init__ (ones / zeros).
    params = {
        "azimuth_scale": jnp.ones((A,), jnp.float32),
        "azimuth_bias": jnp.zeros((A,), jnp.float32),
        "azimuth_cos_weight": jnp.ones((A,), jnp.float32),
        "azimuth_sin_weight": jnp.ones((A,), jnp.float32),
        "elevation_scale": jnp.ones((E,), jnp.float32),
        "elevation_bias": jnp.zeros((E,), jnp.float32),
        "elevation_cos_weight": jnp.ones((E,), jnp.float32),
        "elevation_sin_weight": jnp.ones((E,), jnp.float32),
        "range_scale": jnp.ones((R,), jnp.float32),
        "range_bias": jnp.zeros((R,), jnp.float32),
    }
    # TODO(synk): self.dropout is declared in __init__ but never used in forward(); nothing to implement.

    key = jax.random.PRNGKey(0)
    polar_frames = jax.random.normal(key, (2, A, R, E), dtype=jnp.float32)

    out = polar_to_cartesian(polar_frames, params, cfg)
    out = jax.block_until_ready(out)

    ref = reference(polar_frames, params, cfg)
    assert out.shape == (2, A * R * E, 4), out.shape
    np.testing.assert_allclose(np.asarray(out), np.asarray(ref), rtol=1e-5, atol=1e-5)
    print("KERNEL_OK")
</pallas_src>

<mosaic_0001>
module attributes {stable_mosaic.version = 11 : i64} {
  func.func @polar_to_cartesian_kernel(%arg0: memref<3x128xf32, #tpu.memory_space<vmem>>, %arg1: memref<8x2xf32, #tpu.memory_space<vmem>>, %arg2: memref<2x8x128xf32, #tpu.memory_space<vmem>>, %arg3: memref<4x2x8x128xf32, #tpu.memory_space<vmem>>) attributes {dimension_semantics = [], scalar_prefetch = 0 : i64, scratch_operands = 0 : i64, tpu.core_type = #tpu.core_type<tc>} {
    %c0 = arith.constant 0 : index
    %c0_0 = arith.constant 0 : index
    %0 = vector.load %arg0[%c0, %c0_0] : memref<3x128xf32, #tpu.memory_space<vmem>>, vector<1x128xf32>
    %c1 = arith.constant 1 : index
    %c0_1 = arith.constant 0 : index
    %1 = vector.load %arg0[%c1, %c0_1] : memref<3x128xf32, #tpu.memory_space<vmem>>, vector<1x128xf32>
    %c2 = arith.constant 2 : index
    %c0_2 = arith.constant 0 : index
    %2 = vector.load %arg0[%c2, %c0_2] : memref<3x128xf32, #tpu.memory_space<vmem>>, vector<1x128xf32>
    %c0_3 = arith.constant 0 : index
    %c0_4 = arith.constant 0 : index
    %3 = vector.load %arg1[%c0_3, %c0_4] : memref<8x2xf32, #tpu.memory_space<vmem>>, vector<8x1xf32>
    %c0_5 = arith.constant 0 : index
    %c1_6 = arith.constant 1 : index
    %4 = vector.load %arg1[%c0_5, %c1_6] : memref<8x2xf32, #tpu.memory_space<vmem>>, vector<8x1xf32>
    %5 = vector.broadcast %3 : vector<8x1xf32> to vector<8x128xf32>
    %6 = vector.broadcast %0 : vector<1x128xf32> to vector<8x128xf32>
    %7 = arith.mulf %5, %6 : vector<8x128xf32>
    %8 = vector.broadcast %3 : vector<8x1xf32> to vector<8x128xf32>
    %9 = vector.broadcast %1 : vector<1x128xf32> to vector<8x128xf32>
    %10 = arith.mulf %8, %9 : vector<8x128xf32>
    %11 = vector.broadcast %4 : vector<8x1xf32> to vector<8x128xf32>
    %12 = vector.broadcast %2 : vector<1x128xf32> to vector<8x128xf32>
    %13 = arith.mulf %11, %12 : vector<8x128xf32>
    %14 = vector.shape_cast %7 : vector<8x128xf32> to vector<1x8x128xf32>
    %15 = vector.broadcast %14 : vector<1x8x128xf32> to vector<2x8x128xf32>
    %c0_7 = arith.constant 0 : index
    %c0_8 = arith.constant 0 : index
    %c0_9 = arith.constant 0 : index
    %c0_10 = arith.constant 0 : index
    %16 = vector.load %arg3[%c0_7, %c0_8, %c0_9, %c0_10] : memref<4x2x8x128xf32, #tpu.memory_space<vmem>>, vector<1x2x8x128xf32>
    %17 = vector.shape_cast %16 : vector<1x2x8x128xf32> to vector<2x8x128xf32>
    %18 = vector.shape_cast %15 : vector<2x8x128xf32> to vector<1x2x8x128xf32>
    tpu.vector_store %arg3[%c0_7, %c0_8, %c0_9, %c0_10], %18 {strides = array<i32>} : memref<4x2x8x128xf32, #tpu.memory_space<vmem>>, vector<1x2x8x128xf32>,
    %19 = vector.shape_cast %10 : vector<8x128xf32> to vector<1x8x128xf32>
    %20 = vector.broadcast %19 : vector<1x8x128xf32> to vector<2x8x128xf32>
    %c1_11 = arith.constant 1 : index
    %c0_12 = arith.constant 0 : index
    %c0_13 = arith.constant 0 : index
    %c0_14 = arith.constant 0 : index
    %21 = vector.load %arg3[%c1_11, %c0_12, %c0_13, %c0_14] : memref<4x2x8x128xf32, #tpu.memory_space<vmem>>, vector<1x2x8x128xf32>
    %22 = vector.shape_cast %21 : vector<1x2x8x128xf32> to vector<2x8x128xf32>
    %23 = vector.shape_cast %20 : vector<2x8x128xf32> to vector<1x2x8x128xf32>
    tpu.vector_store %arg3[%c1_11, %c0_12, %c0_13, %c0_14], %23 {strides = array<i32>} : memref<4x2x8x128xf32, #tpu.memory_space<vmem>>, vector<1x2x8x128xf32>,
    %24 = vector.shape_cast %13 : vector<8x128xf32> to vector<1x8x128xf32>
    %25 = vector.broadcast %24 : vector<1x8x128xf32> to vector<2x8x128xf32>
    %c2_15 = arith.constant 2 : index
    %c0_16 = arith.constant 0 : index
    %c0_17 = arith.constant 0 : index
    %c0_18 = arith.constant 0 : index
    %26 = vector.load %arg3[%c2_15, %c0_16, %c0_17, %c0_18] : memref<4x2x8x128xf32, #tpu.memory_space<vmem>>, vector<1x2x8x128xf32>
    %27 = vector.shape_cast %26 : vector<1x2x8x128xf32> to vector<2x8x128xf32>
    %28 = vector.shape_cast %25 : vector<2x8x128xf32> to vector<1x2x8x128xf32>
    tpu.vector_store %arg3[%c2_15, %c0_16, %c0_17, %c0_18], %28 {strides = array<i32>} : memref<4x2x8x128xf32, #tpu.memory_space<vmem>>, vector<1x2x8x128xf32>,
    %c0_19 = arith.constant 0 : index
    %c0_20 = arith.constant 0 : index
    %c0_21 = arith.constant 0 : index
    %29 = vector.load %arg2[%c0_19, %c0_20, %c0_21] : memref<2x8x128xf32, #tpu.memory_space<vmem>>, vector<2x8x128xf32>
    %c3 = arith.constant 3 : index
    %c0_22 = arith.constant 0 : index
    %c0_23 = arith.constant 0 : index
    %c0_24 = arith.constant 0 : index
    %30 = vector.load %arg3[%c3, %c0_22, %c0_23, %c0_24] : memref<4x2x8x128xf32, #tpu.memory_space<vmem>>, vector<1x2x8x128xf32>
    %31 = vector.shape_cast %30 : vector<1x2x8x128xf32> to vector<2x8x128xf32>
    %32 = vector.shape_cast %29 : vector<2x8x128xf32> to vector<1x2x8x128xf32>
    tpu.vector_store %arg3[%c3, %c0_22, %c0_23, %c0_24], %32 {strides = array<i32>} : memref<4x2x8x128xf32, #tpu.memory_space<vmem>>, vector<1x2x8x128xf32>,
    return
  }
}

</mosaic_0001>

<llo_original>
// kernel: tpu_custom_call.1
$region0: #{tpu_custom_call.1}
  #allocation0 [shape = 'u32[]', space=smem, size = 0x4, offset = 0x4, fixed_abs, tag = 'smem constant byte address 0x4 - core index']
  #allocation1 [shape = 'u32[144,128]{1,0:T(1,128)}', space=vmem, size = 0x12000, scoped, tag = 'internal scratch']
  %s0 = inlined_call_operand.hbm [shape: f32[3,128], index: 0, kind: input, shape index: {}]
  %s1 = inlined_call_operand.vmem [shape: f32[8,2], index: 1, kind: input, shape index: {}]
  %s2 = inlined_call_operand.vmem [shape: f32[2,8,128], index: 2, kind: input, shape index: {}]
  %s3 = inlined_call_operand.hbm [shape: f32[4,2,8,128], index: 3, kind: output, shape index: {}]
  %s4 = sld [smem:[#allocation0]]
  $region26: #{tpu_custom_call.1} parent=0
    _
  %s6 = ssub.s32 1, %s4
  %s7 = scalar_select 0, %s6, %s4
  $region1: #{tpu_custom_call.1} parent=0
    #allocation2 [shape = 'u8[2048]{0}', space=vmem, size = 0x800, scoped, tag = 'input window, operand 0, single buffered']
    #allocation3 [shape = 's32[1]{0}', space=sflag, size = 0x4, scoped, tag = 'scoped memory for tpu_custom_call.1']
    #allocation4 [shape = 's32[1]{0}', space=sflag, size = 0x4, scoped, tag = 'scoped memory for tpu_custom_call.1']
    #allocation5 [shape = 'u8[32768]{0}', space=vmem, size = 0x8000, scoped, tag = 'output window, operand 0, single buffered']
    %8 = vsyncpa [#allocation3], 0
    %9 = vsyncpa [#allocation4], 0
    // Predicated region
    $region2: #{tpu_custom_call.1} parent=1 // pred_check
      _
    $region3: #{tpu_custom_call.1} parent=1 // pred_check_branch
      %11 = sbr.rel (0) target = $region5
    $region4: #{tpu_custom_call.1} parent=1 // pred_region
      %s13 = ssub.s32 64, 64
      %14 = vsyncadd [#allocation3], %s13
      %s16 = sshll.u32 [#allocation2], 4
      %s17 = int_to_ptr.vmem [resolvable:$true] %s16
      %19 = dma.hbm_to_vmem [thread:$0]  %s0, 64, %s17, [#allocation3]
    $region5: #{tpu_custom_call.1} parent=1 // pred_fallthru
      _
    // Predicated region
    $region6: #{tpu_custom_call.1} parent=1 // pred_check
      _
    $region7: #{tpu_custom_call.1} parent=1 // pred_check_branch
      %21 = sbr.rel (0) target = $region9
    $region8: #{tpu_custom_call.1} parent=1 // pred_region
      _
    $region9: #{tpu_custom_call.1} parent=1 // pred_fallthru
      _
    // Predicated region
    $region10: #{tpu_custom_call.1} parent=1 // pred_check
      _
    $region11: #{tpu_custom_call.1} parent=1 // pred_check_branch
      %23 = sbr.rel (0) target = $region13
    $region12: #{tpu_custom_call.1} parent=1 // pred_region
      _
    $region13: #{tpu_custom_call.1} parent=1 // pred_fallthru
      _
    // Predicated region
    $region14: #{tpu_custom_call.1} parent=1 // pred_check
      _
    $region15: #{tpu_custom_call.1} parent=1 // pred_check_branch
      %25 = sbr.rel (0) target = $region17
    $region16: #{tpu_custom_call.1} parent=1 // pred_region
      %26 = dma.done [#allocation3], 64
    $region17: #{tpu_custom_call.1} parent=1 // pred_fallthru
      _
    %v27 = vld [vmem:[#allocation2] sm:$0x1]
    %v28 = vld [vmem:[#allocation2 + $0x1] sm:$0x1]
    %v29 = vld [vmem:[#allocation2 + $0x2] sm:$0x1]
    %v30 = vld [vmem:[%s1] sm:$0xff]
    %32 = vset.pattern.permute.xlu0 0
    %33 = vperm.xlu0 %32, %v30
    %v34 = vpop.permute.xlu0 %33
    %v36 = vlaneseq
    %v37 = vshrl.u32 %v36, 7
    %v38 = vsub.s32 0, %v37
    %v39 = vrot.slane %v27, %v38
    %v40 = vmul.f32 %v34, %v39
    %v41 = vlaneseq
    %v42 = vshrl.u32 %v41, 7
    %v43 = vsub.s32 0, %v42
    %v44 = vrot.slane %v28, %v43
    %v45 = vmul.f32 %v34, %v44
    %46 = vset.pattern.permute.xlu0 1
    %47 = vperm.xlu0 %46, %v30
    %v48 = vpop.permute.xlu0 %47
    %v50 = vlaneseq
    %v51 = vshrl.u32 %v50, 7
    %v52 = vsub.s32 0, %v51
    %v53 = vrot.slane %v29, %v52
    %v54 = vmul.f32 %v48, %v53
    %55 = vst [vmem:[#allocation5] sm:$0xff] %v40
    %56 = vst [vmem:[#allocation5 + $0x8] sm:$0xff] %v40
    %s57 = scalar_lea.vmem [#allocation5], 16
    %58 = vst [vmem:[%s57] sm:$0xff] %v45
    %59 = vst [vmem:[%s57 + $0x8] sm:$0xff] %v45
    %s60 = scalar_lea.vmem [#allocation5], 32
    %61 = vst [vmem:[%s60] sm:$0xff] %v54
    %62 = vst [vmem:[%s60 + $0x8] sm:$0xff] %v54
    %v63 = vld [vmem:[%s2] sm:$0xff]
    %v64 = vld [vmem:[%s2 + $0x8] sm:$0xff]
    %s65 = scalar_lea.vmem [#allocation5], 48
    %66 = vst [vmem:[%s65] sm:$0xff] %v63
    %67 = vst [vmem:[%s65 + $0x8] sm:$0xff] %v64
    // Predicated region
    $region18: #{tpu_custom_call.1} parent=1 // pred_check
      _
    $region19: #{tpu_custom_call.1} parent=1 // pred_check_branch
      %69 = sbr.rel (0) target = $region21
    $region20: #{tpu_custom_call.1} parent=1 // pred_region
      %s71 = ssub.s32 1024, 1024
      %72 = vsyncadd [#allocation4], %s71
      %s73 = sshll.u32 [#allocation5], 4
      %s74 = int_to_ptr.vmem [resolvable:$true] %s73
      %79 = dma.vmem_to_hbm [thread:$0]  %s74, 1024, %s3, [#allocation4], 128, 128, 8
    $region21: #{tpu_custom_call.1} parent=1 // pred_fallthru
      _
    // Predicated region
    $region22: #{tpu_custom_call.1} parent=1 // pred_check
      _
    $region23: #{tpu_custom_call.1} parent=1 // pred_check_branch
      %81 = sbr.rel (0) target = $region25
    $region24: #{tpu_custom_call.1} parent=1 // pred_region
      %82 = dma.done [#allocation4], 1024
    $region25: #{tpu_custom_call.1} parent=1 // pred_fallthru
      _
    %83 = vsyncpa [#allocation3], 1
    %84 = vsyncpa [#allocation4], 1

</llo_original>
